<compile_context>
chip_gen: v7x
topology: tpu7x:2x2x1
jax: 0.10.0
libtpu: 0.0.40
codegen_flags: <defaults>
</compile_context>

<pallas_src>
import jax
import jax.numpy as jnp
from jax.experimental import pallas as pl
from jax.experimental.pallas import tpu as pltpu

# ---- static config (synthetic, mirrors cfg.model / cfg.model_num) ----------
MODEL_NUM = 2      # number of Q heads in the ensemble
OBS_DIM = 16
ACT_DIM = 8
HIDDEN = 32
BATCH = 8

D_IN = OBS_DIM + ACT_DIM          # 24
MH = MODEL_NUM * HIDDEN           # 64

# Static row offsets inside the packed weight slab (all multiples of 8 ->
# sublane-aligned slices, no re-layout cost).
_W1O_OFF = 0                      # W1 rows that multiply `obs`   : (16, MH)
_W1A_OFF = OBS_DIM                # W1 rows that multiply `action`: ( 8, MH)
_W2_OFF = D_IN                    # block-diagonal W2             : (MH, MH)
_W3_OFF = D_IN + MH               # block-diagonal W3, zero-padded: (MH, MH)
_WSLAB_ROWS = D_IN + 2 * MH       # 152


def qmodel_kernel(obs_ref, act_ref, w_ref, b_ref, out_ref):
    cdt = w_ref.dtype                                   # MXU input dtype (f32 or bf16)

    # Zero-cost static views into the single weight slab.
    w1o = w_ref[_W1O_OFF:_W1A_OFF, :]                   # (OBS_DIM, MH)
    w1a = w_ref[_W1A_OFF:_W2_OFF, :]                    # (ACT_DIM, MH)
    w2 = w_ref[_W2_OFF:_W3_OFF, :]                      # (MH, MH) block-diagonal
    w3 = w_ref[_W3_OFF:_WSLAB_ROWS, :]                  # (MH, MH), cols >= M are zero
    b = b_ref[...]                                      # (3, MH) f32: b1 / b2 / b3(pad)

    # Layer 1: concat-free — two MXU pushes summed into one f32 accumulator.
    h = (jnp.dot(obs_ref[...].astype(cdt), w1o, preferred_element_type=jnp.float32)
         + jnp.dot(act_ref[...].astype(cdt), w1a, preferred_element_type=jnp.float32)
         + b[0:1, :])
    h = jnp.maximum(h, 0.0)

    # Layer 2: all ensemble members in one block-diagonal matmul.
    h = jnp.dot(h.astype(cdt), w2, preferred_element_type=jnp.float32) + b[1:2, :]
    h = jnp.maximum(h, 0.0)

    # Layer 3: block-diagonal (zero-padded) head matmul; keep the first M lanes.
    out_full = jnp.dot(h.astype(cdt), w3, preferred_element_type=jnp.float32) + b[2:3, :]
    out_ref[...] = out_full[:, :MODEL_NUM]


# ---- one-time, init-side weight packing (NOT in the per-step path) ----------
def pack_params(w1, b1, w2, b2, w3, b3, compute_dtype=jnp.float32):
    """Pack ensemble params into two VMEM-ready slabs.  Call once at init."""
    m, d_in, h = w1.shape

    # W1 column-packed: (d_in, M*H); model i occupies columns i*H:(i+1)*H.
    w1p = jnp.transpose(w1, (1, 0, 2)).reshape(d_in, m * h)
    # W2 block-diagonal: (M*H, M*H).
    w2bd = jax.scipy.linalg.block_diag(*[w2[i] for i in range(m)])
    # W3 block-diagonal (M*H, M), zero-padded to (M*H, M*H) so it row-stacks.
    w3bd = jax.scipy.linalg.block_diag(*[w3[i] for i in range(m)])
    w3pad = jnp.zeros((m * h, m * h), w3.dtype).at[:, :m].set(w3bd)

    wslab = jnp.concatenate([w1p, w2bd, w3pad], axis=0).astype(compute_dtype)

    b3pad = jnp.zeros((1, m * h), b3.dtype).at[:, :m].set(b3.reshape(1, m))
    bslab = jnp.concatenate(
        [b1.reshape(1, m * h), b2.reshape(1, m * h), b3pad], axis=0
    ).astype(jnp.float32)

    return jax.device_put(wslab), jax.device_put(bslab)


# ---- per-step forward: just the pallas_call, no repacking -------------------
@jax.jit
def qmodel_forward(obs, action, wslab, bslab):
    B = obs.shape[0]
    args = (obs, action, wslab, bslab)
    # No grid: whole arrays live in VMEM, kernel body runs exactly once.
    return pl.pallas_call(
        qmodel_kernel,
        out_shape=jax.ShapeDtypeStruct((B, MODEL_NUM), jnp.float32),
        in_specs=[pl.BlockSpec(memory_space=pltpu.MemorySpace.VMEM)
                  for _ in args],
        out_specs=pl.BlockSpec(memory_space=pltpu.MemorySpace.VMEM),
    )(*args)


def init_params(key):
    """Deterministic init matching nn.Linear default (uniform +-1/sqrt(fan_in))."""
    shapes = [
        ((MODEL_NUM, D_IN, HIDDEN), (MODEL_NUM, 1, HIDDEN), D_IN),       # layer 1
        ((MODEL_NUM, HIDDEN, HIDDEN), (MODEL_NUM, 1, HIDDEN), HIDDEN),   # layer 2
        ((MODEL_NUM, HIDDEN, 1), (MODEL_NUM, 1, 1), HIDDEN),             # layer 3
    ]
    params = []
    for (w_shape, b_shape, fan_in) in shapes:
        key, kw, kb = jax.random.split(key, 3)
        bound = 1.0 / jnp.sqrt(jnp.float32(fan_in))
        w = jax.random.uniform(kw, w_shape, jnp.float32, -bound, bound)
        b = jax.random.uniform(kb, b_shape, jnp.float32, -bound, bound)
        params += [w, b]
    return tuple(params)  # (w1, b1, w2, b2, w3, b3)


def reference_forward(obs, action, w1, b1, w2, b2, w3, b3):
    """Pure-JAX reference of the PyTorch forward (per-model loop, explicit concat)."""
    x = jnp.concatenate([obs, action], axis=1)
    outs = []
    for m in range(MODEL_NUM):
        h = jnp.maximum(x @ w1[m] + b1[m], 0.0)
        h = jnp.maximum(h @ w2[m] + b2[m], 0.0)
        outs.append(h @ w3[m] + b3[m])
    return jnp.concatenate(outs, axis=1)


if __name__ == "__main__":
    key = jax.random.PRNGKey(0)
    key, k_obs, k_act = jax.random.split(key, 3)
    obs = jax.random.normal(k_obs, (BATCH, OBS_DIM), jnp.float32)
    action = jax.random.normal(k_act, (BATCH, ACT_DIM), jnp.float32)
    params = init_params(key)

    ref = reference_forward(obs, action, *params)

    # f32 weight path (exact match to the torch forward).
    wslab, bslab = pack_params(*params, compute_dtype=jnp.float32)
    out = jax.block_until_ready(qmodel_forward(obs, action, wslab, bslab))
    assert out.shape == (BATCH, MODEL_NUM), out.shape
    assert jnp.allclose(out, ref, atol=1e-4, rtol=1e-5), (out, ref)

    # bf16 weight path (v6e/v7x MXU-native inputs, f32 accumulate) — same
    # kernel, looser tolerance against the f32 golden reference.
    wslab_bf, bslab_bf = pack_params(*params, compute_dtype=jnp.bfloat16)
    out_bf = jax.block_until_ready(qmodel_forward(obs, action, wslab_bf, bslab_bf))
    assert out_bf.shape == (BATCH, MODEL_NUM), out_bf.shape
    assert jnp.allclose(out_bf, ref, atol=5e-2, rtol=5e-2), (out_bf, ref)

    print("KERNEL_OK")
</pallas_src>

<mosaic_0001>
module attributes {stable_mosaic.version = 11 : i64} {
  func.func @qmodel_kernel(%arg0: memref<8x16xf32, #tpu.memory_space<vmem>>, %arg1: memref<8x8xf32, #tpu.memory_space<vmem>>, %arg2: memref<152x64xf32, #tpu.memory_space<vmem>>, %arg3: memref<3x64xf32, #tpu.memory_space<vmem>>, %arg4: memref<8x2xf32, #tpu.memory_space<vmem>>) attributes {dimension_semantics = [], scalar_prefetch = 0 : i64, scratch_operands = 0 : i64, tpu.core_type = #tpu.core_type<tc>} {
    %c0 = arith.constant 0 : index
    %c0_0 = arith.constant 0 : index
    %0 = vector.load %arg2[%c0, %c0_0] : memref<152x64xf32, #tpu.memory_space<vmem>>, vector<16x64xf32>
    %c16 = arith.constant 16 : index
    %c0_1 = arith.constant 0 : index
    %1 = vector.load %arg2[%c16, %c0_1] : memref<152x64xf32, #tpu.memory_space<vmem>>, vector<8x64xf32>
    %c24 = arith.constant 24 : index
    %c0_2 = arith.constant 0 : index
    %2 = vector.load %arg2[%c24, %c0_2] : memref<152x64xf32, #tpu.memory_space<vmem>>, vector<64x64xf32>
    %c88 = arith.constant 88 : index
    %c0_3 = arith.constant 0 : index
    %3 = vector.load %arg2[%c88, %c0_3] : memref<152x64xf32, #tpu.memory_space<vmem>>, vector<64x64xf32>
    %c0_4 = arith.constant 0 : index
    %c0_5 = arith.constant 0 : index
    %4 = vector.load %arg3[%c0_4, %c0_5] : memref<3x64xf32, #tpu.memory_space<vmem>>, vector<3x64xf32>
    %c0_6 = arith.constant 0 : index
    %c0_7 = arith.constant 0 : index
    %5 = vector.load %arg0[%c0_6, %c0_7] : memref<8x16xf32, #tpu.memory_space<vmem>>, vector<8x16xf32>
    %cst = arith.constant dense<0.000000e+00> : vector<8x64xf32>
    %6 = tpu.matmul %5, %0, %cst {dimension_numbers = #tpu.dot_dimension_numbers<[1], [0], [0], [1], [0, 0, 1, 1], [], []>} : vector<8x16xf32>, vector<16x64xf32>, vector<8x64xf32> -> vector<8x64xf32>
    %c0_8 = arith.constant 0 : index
    %c0_9 = arith.constant 0 : index
    %7 = vector.load %arg1[%c0_8, %c0_9] : memref<8x8xf32, #tpu.memory_space<vmem>>, vector<8x8xf32>
    %cst_10 = arith.constant dense<0.000000e+00> : vector<8x64xf32>
    %8 = tpu.matmul %7, %1, %cst_10 {dimension_numbers = #tpu.dot_dimension_numbers<[1], [0], [0], [1], [0, 0, 1, 1], [], []>} : vector<8x8xf32>, vector<8x64xf32>, vector<8x64xf32> -> vector<8x64xf32>
    %9 = arith.addf %6, %8 : vector<8x64xf32>
    %10 = vector.extract_strided_slice %4 {offsets = [0, 0], sizes = [1, 64], strides = [1, 1]} : vector<3x64xf32> to vector<1x64xf32>
    %11 = vector.broadcast %10 : vector<1x64xf32> to vector<8x64xf32>
    %12 = arith.addf %9, %11 : vector<8x64xf32>
    %cst_11 = arith.constant 0.000000e+00 : f32
    %13 = vector.broadcast %cst_11 : f32 to vector<8x64xf32>
    %14 = arith.maximumf %12, %13 : vector<8x64xf32>
    %cst_12 = arith.constant dense<0.000000e+00> : vector<8x64xf32>
    %15 = tpu.matmul %14, %2, %cst_12 {dimension_numbers = #tpu.dot_dimension_numbers<[1], [0], [0], [1], [0, 0, 1, 1], [], []>} : vector<8x64xf32>, vector<64x64xf32>, vector<8x64xf32> -> vector<8x64xf32>
    %16 = vector.extract_strided_slice %4 {offsets = [1, 0], sizes = [1, 64], strides = [1, 1]} : vector<3x64xf32> to vector<1x64xf32>
    %17 = vector.broadcast %16 : vector<1x64xf32> to vector<8x64xf32>
    %18 = arith.addf %15, %17 : vector<8x64xf32>
    %cst_13 = arith.constant 0.000000e+00 : f32
    %19 = vector.broadcast %cst_13 : f32 to vector<8x64xf32>
    %20 = arith.maximumf %18, %19 : vector<8x64xf32>
    %cst_14 = arith.constant dense<0.000000e+00> : vector<8x64xf32>
    %21 = tpu.matmul %20, %3, %cst_14 {dimension_numbers = #tpu.dot_dimension_numbers<[1], [0], [0], [1], [0, 0, 1, 1], [], []>} : vector<8x64xf32>, vector<64x64xf32>, vector<8x64xf32> -> vector<8x64xf32>
    %22 = vector.extract_strided_slice %4 {offsets = [2, 0], sizes = [1, 64], strides = [1, 1]} : vector<3x64xf32> to vector<1x64xf32>
    %23 = vector.broadcast %22 : vector<1x64xf32> to vector<8x64xf32>
    %24 = arith.addf %21, %23 : vector<8x64xf32>
    %25 = vector.extract_strided_slice %24 {offsets = [0, 0], sizes = [8, 2], strides = [1, 1]} : vector<8x64xf32> to vector<8x2xf32>
    %c0_15 = arith.constant 0 : index
    %c0_16 = arith.constant 0 : index
    %26 = vector.load %arg4[%c0_15, %c0_16] : memref<8x2xf32, #tpu.memory_space<vmem>>, vector<8x2xf32>
    tpu.vector_store %arg4[%c0_15, %c0_16], %25 {strides = array<i32>} : memref<8x2xf32, #tpu.memory_space<vmem>>, vector<8x2xf32>,
    return
  }
}

</mosaic_0001>

<llo_original>
// kernel: qmodel_forward.1
$region0: #{qmodel_forward.1}
  #allocation0 [shape = 'u32[]', space=smem, size = 0x4, offset = 0x4, fixed_abs, tag = 'smem constant byte address 0x4 - core index']
  #allocation1 [shape = 'u32[144,128]{1,0:T(1,128)}', space=vmem, size = 0x12000, scoped, tag = 'internal scratch']
  %s0 = inlined_call_operand.vmem [shape: f32[8,16], index: 0, kind: input, shape index: {}]
  %s1 = inlined_call_operand.vmem [shape: f32[8,8], index: 1, kind: input, shape index: {}]
  %s2 = inlined_call_operand.vmem [shape: f32[152,64], index: 2, kind: input, shape index: {}]
  %s3 = inlined_call_operand.vmem [shape: f32[3,64], index: 3, kind: input, shape index: {}]
  %s4 = inlined_call_operand.vmem [shape: f32[8,2], index: 4, kind: output, shape index: {}]
  %s5 = sld [smem:[#allocation0]]
  $region26: #{qmodel_forward.1} parent=0
    _
  %s7 = ssub.s32 1, %s5
  %s8 = scalar_select 0, %s7, %s5
  // Predicated region
  $region2: #{qmodel_forward.1} parent=0 // pred_check
    _
  $region3: #{qmodel_forward.1} parent=0 // pred_check_branch
    %10 = sbr.rel (0) target = $region5
  $region4: #{qmodel_forward.1} parent=0 // pred_region
    _
  $region5: #{qmodel_forward.1} parent=0 // pred_fallthru
    _
  // Predicated region
  $region6: #{qmodel_forward.1} parent=0 // pred_check
    _
  $region7: #{qmodel_forward.1} parent=0 // pred_check_branch
    %12 = sbr.rel (0) target = $region9
  $region8: #{qmodel_forward.1} parent=0 // pred_region
    _
  $region9: #{qmodel_forward.1} parent=0 // pred_fallthru
    _
  // Predicated region
  $region10: #{qmodel_forward.1} parent=0 // pred_check
    _
  $region11: #{qmodel_forward.1} parent=0 // pred_check_branch
    %14 = sbr.rel (0) target = $region13
  $region12: #{qmodel_forward.1} parent=0 // pred_region
    _
  $region13: #{qmodel_forward.1} parent=0 // pred_fallthru
    _
  // Predicated region
  $region14: #{qmodel_forward.1} parent=0 // pred_check
    _
  $region15: #{qmodel_forward.1} parent=0 // pred_check_branch
    %16 = sbr.rel (0) target = $region17
  $region16: #{qmodel_forward.1} parent=0 // pred_region
    _
  $region17: #{qmodel_forward.1} parent=0 // pred_fallthru
    _
  %v17 = vld [vmem:[%s2] sm:$0xff]
  %v18 = vld [vmem:[%s2 + $0x8] sm:$0xff]
  %v19 = vld [vmem:[%s2 + $0x10] sm:$0xff]
  %v20 = vld [vmem:[%s2 + $0x18] sm:$0xff]
  %v21 = vld [vmem:[%s2 + $0x20] sm:$0xff]
  %v22 = vld [vmem:[%s2 + $0x28] sm:$0xff]
  %v23 = vld [vmem:[%s2 + $0x30] sm:$0xff]
  %v24 = vld [vmem:[%s2 + $0x38] sm:$0xff]
  %v25 = vld [vmem:[%s2 + $0x40] sm:$0xff]
  %v26 = vld [vmem:[%s2 + $0x48] sm:$0xff]
  %v27 = vld [vmem:[%s2 + $0x50] sm:$0xff]
  %v28 = vld [vmem:[%s2 + $0x58] sm:$0xff]
  %v29 = vld [vmem:[%s2 + $0x60] sm:$0xff]
  %v30 = vld [vmem:[%s2 + $0x68] sm:$0xff]
  %v31 = vld [vmem:[%s2 + $0x70] sm:$0xff]
  %v32 = vld [vmem:[%s2 + $0x78] sm:$0xff]
  %v33 = vld [vmem:[%s2 + $0x80] sm:$0xff]
  %v34 = vld [vmem:[%s2 + $0x88] sm:$0xff]
  %v35 = vld [vmem:[%s2 + $0x90] sm:$0xff]
  %v36 = vld [vmem:[%s3] sm:$0x7]
  %v37 = vld [vmem:[%s0] sm:$0xff]
  %v38 = vld [vmem:[%s1] sm:$0xff]
  %vm39 = vcmask 64512
  %v41 = vsel %vm39, %v38, 0
  %43 = vmatprep.subr.mxu0 0.0
  %44 = vmatpush1.msra.mxu0 %v19
  %45 = vmatprep.subr.mxu0 0.0
  %46 = vmatpush1.msra.mxu0 0.0
  %47 = vmatprep.subr.mxu0 0.0
  %48 = vmatpush1.msra.mxu0 0.0
  %49 = vmatprep.subr.mxu0 0.0
  %50 = vmatpush1.msra.mxu0 0.0
  %51 = vmatprep.subr.mxu0 0.0
  %52 = vmatpush1.msra.mxu0 0.0
  %53 = vmatprep.subr.mxu0 0.0
  %54 = vmatpush1.msra.mxu0 0.0
  %55 = vmatprep.subr.mxu0 0.0
  %56 = vmatpush1.msra.mxu0 0.0
  %57 = vmatprep.subr.mxu0 0.0
  %58 = vmatpush1.msra.mxu0 0.0
  %59 = vmatprep.subr.mxu0 0.0
  %60 = vmatpush1.msra.mxu0 0.0
  %61 = vmatprep.subr.mxu0 0.0
  %62 = vmatpush1.msra.mxu0 0.0
  %63 = vmatprep.subr.mxu0 0.0
  %64 = vmatpush1.msra.mxu0 0.0
  %65 = vmatprep.subr.mxu0 0.0
  %66 = vmatpush1.msra.mxu0 0.0
  %67 = vmatprep.subr.mxu0 0.0
  %68 = vmatpush1.msra.mxu0 0.0
  %69 = vmatprep.subr.mxu0 0.0
  %70 = vmatpush1.msra.mxu0 0.0
  %71 = vmatprep.subr.mxu0 0.0
  %72 = vmatpush1.msra.mxu0 0.0
  %73 = vmatprep.subr.mxu0 0.0
  %74 = vmatpush1.msra.mxu0 0.0
  %75 = vmatprep.subr.mxu0 0.0
  %76 = vmatpush1.msra.mxu0 0.0
  %77 = vmatprep.subr.mxu0 0.0
  %78 = vmatpush1.msra.mxu0 0.0
  %79 = vmatprep.subr.mxu0 0.0
  %80 = vmatpush1.msra.mxu0 0.0
  %81 = vmatprep.subr.mxu0 0.0
  %82 = vmatpush1.msra.mxu0 0.0
  %83 = vmatprep.subr.mxu0 0.0
  %84 = vmatpush1.msra.mxu0 0.0
  %85 = vmatprep.subr.mxu0 0.0
  %86 = vmatpush1.msra.mxu0 0.0
  %87 = vmatprep.subr.mxu0 0.0
  %88 = vmatpush1.msra.mxu0 0.0
  %89 = vmatprep.subr.mxu0 0.0
  %90 = vmatpush1.msra.mxu0 0.0
  %91 = vmatprep.subr.mxu0 0.0
  %92 = vmatpush1.msra.mxu0 0.0
  %93 = vmatprep.subr.mxu0 0.0
  %94 = vmatpush1.msra.mxu0 0.0
  %95 = vmatprep.subr.mxu0 0.0
  %96 = vmatpush1.msra.mxu0 0.0
  %97 = vmatprep.subr.mxu0 0.0
  %98 = vmatpush1.msra.mxu0 0.0
  %99 = vmatprep.subr.mxu0 0.0
  %100 = vmatpush1.msra.mxu0 0.0
  %101 = vmatprep.subr.mxu0 0.0
  %102 = vmatpush1.msra.mxu0 0.0
  %103 = vmatprep.subr.mxu0 0.0
  %104 = vmatpush1.msra.mxu0 0.0
  %105 = vmatprep.subr.mxu0 0.0
  %106 = vmatpush1.msra.mxu0 0.0
  %107 = vmatprep.mubr.f32.mxu0 0.0
  %108 = vmatmul.mubr.f32.gmra.mrb[0].mxu0 %v41
  %v109 = vpop.f32.mrb[0].mxu0
  %v110 = vadd.f32 0.0, %v109
  %v111 = vpop.f32.mrb[0].mxu0
  %112 = vdwg.mxu0
  %vm113 = vcmask 130048
  %v115 = vsel %vm113, %v37, 0
  %117 = vmatprep.subr.mxu0 0.0
  %118 = vmatpush1.msra.mxu0 %v17
  %119 = vmatprep.subr.mxu0 0.0
  %120 = vmatpush1.msra.mxu0 %v18
  %121 = vmatprep.subr.mxu0 0.0
  %122 = vmatpush1.msra.mxu0 0.0
  %123 = vmatprep.subr.mxu0 0.0
  %124 = vmatpush1.msra.mxu0 0.0
  %125 = vmatprep.subr.mxu0 0.0
  %126 = vmatpush1.msra.mxu0 0.0
  %127 = vmatprep.subr.mxu0 0.0
  %128 = vmatpush1.msra.mxu0 0.0
  %129 = vmatprep.subr.mxu0 0.0
  %130 = vmatpush1.msra.mxu0 0.0
  %131 = vmatprep.subr.mxu0 0.0
  %132 = vmatpush1.msra.mxu0 0.0
  %133 = vmatprep.subr.mxu0 0.0
  %134 = vmatpush1.msra.mxu0 0.0
  %135 = vmatprep.subr.mxu0 0.0
  %136 = vmatpush1.msra.mxu0 0.0
  %137 = vmatprep.subr.mxu0 0.0
  %138 = vmatpush1.msra.mxu0 0.0
  %139 = vmatprep.subr.mxu0 0.0
  %140 = vmatpush1.msra.mxu0 0.0
  %141 = vmatprep.subr.mxu0 0.0
  %142 = vmatpush1.msra.mxu0 0.0
  %143 = vmatprep.subr.mxu0 0.0
  %144 = vmatpush1.msra.mxu0 0.0
  %145 = vmatprep.subr.mxu0 0.0
  %146 = vmatpush1.msra.mxu0 0.0
  %147 = vmatprep.subr.mxu0 0.0
  %148 = vmatpush1.msra.mxu0 0.0
  %149 = vmatprep.subr.mxu0 0.0
  %150 = vmatpush1.msra.mxu0 0.0
  %151 = vmatprep.subr.mxu0 0.0
  %152 = vmatpush1.msra.mxu0 0.0
  %153 = vmatprep.subr.mxu0 0.0
  %154 = vmatpush1.msra.mxu0 0.0
  %155 = vmatprep.subr.mxu0 0.0
  %156 = vmatpush1.msra.mxu0 0.0
  %157 = vmatprep.subr.mxu0 0.0
  %158 = vmatpush1.msra.mxu0 0.0
  %159 = vmatprep.subr.mxu0 0.0
  %160 = vmatpush1.msra.mxu0 0.0
  %161 = vmatprep.subr.mxu0 0.0
  %162 = vmatpush1.msra.mxu0 0.0
  %163 = vmatprep.subr.mxu0 0.0
  %164 = vmatpush1.msra.mxu0 0.0
  %165 = vmatprep.subr.mxu0 0.0
  %166 = vmatpush1.msra.mxu0 0.0
  %167 = vmatprep.subr.mxu0 0.0
  %168 = vmatpush1.msra.mxu0 0.0
  %169 = vmatprep.subr.mxu0 0.0
  %170 = vmatpush1.msra.mxu0 0.0
  %171 = vmatprep.subr.mxu0 0.0
  %172 = vmatpush1.msra.mxu0 0.0
  %173 = vmatprep.subr.mxu0 0.0
  %174 = vmatpush1.msra.mxu0 0.0
  %175 = vmatprep.subr.mxu0 0.0
  %176 = vmatpush1.msra.mxu0 0.0
  %177 = vmatprep.subr.mxu0 0.0
  %178 = vmatpush1.msra.mxu0 0.0
  %179 = vmatprep.subr.mxu0 0.0
  %180 = vmatpush1.msra.mxu0 0.0
  %181 = vmatprep.mubr.f32.mxu0 0.0
  %182 = vmatmul.mubr.f32.gmra.mrb[0].mxu0 %v115
  %v183 = vpop.f32.mrb[0].mxu0
  %v184 = vadd.f32 %v110, %v183
  %v185 = vpop.f32.mrb[0].mxu0
  %186 = vdwg.mxu0
  %v187 = vlaneseq
  %v188 = vshrl.u32 %v187, 7
  %v189 = vsub.s32 0, %v188
  %v190 = vrot.slane %v36, %v189
  %v191 = vadd.f32 %v184, %v190
  %v192 = vmax.f32 %v191, 0.0
  %v193 = vlaneseq
  %v194 = vshrl.u32 %v193, 7
  %v195 = vsub.s32 1, %v194
  %v196 = vrot.slane %v36, %v195
  %vm197 = vcmask 523264
  %v199 = vsel %vm197, %v192, 0
  %201 = vmatprep.subr.mxu0 0.0
  %202 = vmatpush1.msra.mxu0 %v20
  %203 = vmatprep.subr.mxu0 0.0
  %204 = vmatpush1.msra.mxu0 %v21
  %205 = vmatprep.subr.mxu0 0.0
  %206 = vmatpush1.msra.mxu0 %v22
  %207 = vmatprep.subr.mxu0 0.0
  %208 = vmatpush1.msra.mxu0 %v23
  %209 = vmatprep.subr.mxu0 0.0
  %210 = vmatpush1.msra.mxu0 %v24
  %211 = vmatprep.subr.mxu0 0.0
  %212 = vmatpush1.msra.mxu0 %v25
  %213 = vmatprep.subr.mxu0 0.0
  %214 = vmatpush1.msra.mxu0 %v26
  %215 = vmatprep.subr.mxu0 0.0
  %216 = vmatpush1.msra.mxu0 %v27
  %217 = vmatprep.subr.mxu0 0.0
  %218 = vmatpush1.msra.mxu0 0.0
  %219 = vmatprep.subr.mxu0 0.0
  %220 = vmatpush1.msra.mxu0 0.0
  %221 = vmatprep.subr.mxu0 0.0
  %222 = vmatpush1.msra.mxu0 0.0
  %223 = vmatprep.subr.mxu0 0.0
  %224 = vmatpush1.msra.mxu0 0.0
  %225 = vmatprep.subr.mxu0 0.0
  %226 = vmatpush1.msra.mxu0 0.0
  %227 = vmatprep.subr.mxu0 0.0
  %228 = vmatpush1.msra.mxu0 0.0
  %229 = vmatprep.subr.mxu0 0.0
  %230 = vmatpush1.msra.mxu0 0.0
  %231 = vmatprep.subr.mxu0 0.0
  %232 = vmatpush1.msra.mxu0 0.0
  %233 = vmatprep.subr.mxu0 0.0
  %234 = vmatpush1.msra.mxu0 0.0
  %235 = vmatprep.subr.mxu0 0.0
  %236 = vmatpush1.msra.mxu0 0.0
  %237 = vmatprep.subr.mxu0 0.0
  %238 = vmatpush1.msra.mxu0 0.0
  %239 = vmatprep.subr.mxu0 0.0
  %240 = vmatpush1.msra.mxu0 0.0
  %241 = vmatprep.subr.mxu0 0.0
  %242 = vmatpush1.msra.mxu0 0.0
  %243 = vmatprep.subr.mxu0 0.0
  %244 = vmatpush1.msra.mxu0 0.0
  %245 = vmatprep.subr.mxu0 0.0
  %246 = vmatpush1.msra.mxu0 0.0
  %247 = vmatprep.subr.mxu0 0.0
  %248 = vmatpush1.msra.mxu0 0.0
  %249 = vmatprep.subr.mxu0 0.0
  %250 = vmatpush1.msra.mxu0 0.0
  %251 = vmatprep.subr.mxu0 0.0
  %252 = vmatpush1.msra.mxu0 0.0
  %253 = vmatprep.subr.mxu0 0.0
  %254 = vmatpush1.msra.mxu0 0.0
  %255 = vmatprep.subr.mxu0 0.0
  %256 = vmatpush1.msra.mxu0 0.0
  %257 = vmatprep.subr.mxu0 0.0
  %258 = vmatpush1.msra.mxu0 0.0
  %259 = vmatprep.subr.mxu0 0.0
  %260 = vmatpush1.msra.mxu0 0.0
  %261 = vmatprep.subr.mxu0 0.0
  %262 = vmatpush1.msra.mxu0 0.0
  %263 = vmatprep.subr.mxu0 0.0
  %264 = vmatpush1.msra.mxu0 0.0
  %265 = vmatprep.mubr.f32.mxu0 0.0
  %266 = vmatmul.mubr.f32.gmra.mrb[0].mxu0 %v199
  %v267 = vpop.f32.mrb[0].mxu0
  %v268 = vadd.f32 %v196, %v267
  %v269 = vpop.f32.mrb[0].mxu0
  %270 = vdwg.mxu0
  %v271 = vmax.f32 %v268, 0.0
  %v272 = vlaneseq
  %v273 = vshrl.u32 %v272, 7
  %v274 = vsub.s32 2, %v273
  %v275 = vrot.slane %v36, %v274
  %v277 = vsel %vm197, %v271, 0
  %279 = vmatprep.subr.mxu0 0.0
  %280 = vmatpush1.msra.mxu0 %v28
  %281 = vmatprep.subr.mxu0 0.0
  %282 = vmatpush1.msra.mxu0 %v29
  %283 = vmatprep.subr.mxu0 0.0
  %284 = vmatpush1.msra.mxu0 %v30
  %285 = vmatprep.subr.mxu0 0.0
  %286 = vmatpush1.msra.mxu0 %v31
  %287 = vmatprep.subr.mxu0 0.0
  %288 = vmatpush1.msra.mxu0 %v32
  %289 = vmatprep.subr.mxu0 0.0
  %290 = vmatpush1.msra.mxu0 %v33
  %291 = vmatprep.subr.mxu0 0.0
  %292 = vmatpush1.msra.mxu0 %v34
  %293 = vmatprep.subr.mxu0 0.0
  %294 = vmatpush1.msra.mxu0 %v35
  %295 = vmatprep.subr.mxu0 0.0
  %296 = vmatpush1.msra.mxu0 0.0
  %297 = vmatprep.subr.mxu0 0.0
  %298 = vmatpush1.msra.mxu0 0.0
  %299 = vmatprep.subr.mxu0 0.0
  %300 = vmatpush1.msra.mxu0 0.0
  %301 = vmatprep.subr.mxu0 0.0
  %302 = vmatpush1.msra.mxu0 0.0
  %303 = vmatprep.subr.mxu0 0.0
  %304 = vmatpush1.msra.mxu0 0.0
  %305 = vmatprep.subr.mxu0 0.0
  %306 = vmatpush1.msra.mxu0 0.0
  %307 = vmatprep.subr.mxu0 0.0
  %308 = vmatpush1.msra.mxu0 0.0
  %309 = vmatprep.subr.mxu0 0.0
  %310 = vmatpush1.msra.mxu0 0.0
  %311 = vmatprep.subr.mxu0 0.0
  %312 = vmatpush1.msra.mxu0 0.0
  %313 = vmatprep.subr.mxu0 0.0
  %314 = vmatpush1.msra.mxu0 0.0
  %315 = vmatprep.subr.mxu0 0.0
  %316 = vmatpush1.msra.mxu0 0.0
  %317 = vmatprep.subr.mxu0 0.0
  %318 = vmatpush1.msra.mxu0 0.0
  %319 = vmatprep.subr.mxu0 0.0
  %320 = vmatpush1.msra.mxu0 0.0
  %321 = vmatprep.subr.mxu0 0.0
  %322 = vmatpush1.msra.mxu0 0.0
  %323 = vmatprep.subr.mxu0 0.0
  %324 = vmatpush1.msra.mxu0 0.0
  %325 = vmatprep.subr.mxu0 0.0
  %326 = vmatpush1.msra.mxu0 0.0
  %327 = vmatprep.subr.mxu0 0.0
  %328 = vmatpush1.msra.mxu0 0.0
  %329 = vmatprep.subr.mxu0 0.0
  %330 = vmatpush1.msra.mxu0 0.0
  %331 = vmatprep.subr.mxu0 0.0
  %332 = vmatpush1.msra.mxu0 0.0
  %333 = vmatprep.subr.mxu0 0.0
  %334 = vmatpush1.msra.mxu0 0.0
  %335 = vmatprep.subr.mxu0 0.0
  %336 = vmatpush1.msra.mxu0 0.0
  %337 = vmatprep.subr.mxu0 0.0
  %338 = vmatpush1.msra.mxu0 0.0
  %339 = vmatprep.subr.mxu0 0.0
  %340 = vmatpush1.msra.mxu0 0.0
  %341 = vmatprep.subr.mxu0 0.0
  %342 = vmatpush1.msra.mxu0 0.0
  %343 = vmatprep.mubr.f32.mxu0 0.0
  %344 = vmatmul.mubr.f32.gmra.mrb[0].mxu0 %v277
  %v345 = vpop.f32.mrb[0].mxu0
  %v346 = vadd.f32 %v275, %v345
  %v347 = vpop.f32.mrb[0].mxu0
  %348 = vdwg.mxu0
  %vm349 = vcmask 15360
  %350 = vst.msk [vmem:[%s4] sm:$0xff] %vm349, %v346
  // Predicated region
  $region18: #{qmodel_forward.1} parent=0 // pred_check
    _
  $region19: #{qmodel_forward.1} parent=0 // pred_check_branch
    %352 = sbr.rel (0) target = $region21
  $region20: #{qmodel_forward.1} parent=0 // pred_region
    _
  $region21: #{qmodel_forward.1} parent=0 // pred_fallthru
    _
  // Predicated region
  $region22: #{qmodel_forward.1} parent=0 // pred_check
    _
  $region23: #{qmodel_forward.1} parent=0 // pred_check_branch
    %354 = sbr.rel (0) target = $region25
  $region24: #{qmodel_forward.1} parent=0 // pred_region
    _
  $region25: #{qmodel_forward.1} parent=0 // pred_fallthru
    _

</llo_original>
